<compile_context>
chip_gen: v7x
topology: tpu7x:2x2x1
jax: 0.10.0
libtpu: 0.0.40
codegen_flags: <defaults>
</compile_context>

<pallas_src>
import functools

import jax
import jax.numpy as jnp
from jax.experimental import pallas as pl
from jax.experimental.pallas import tpu as pltpu


def _masked_sdpa_kernel(q_ref, k_ref, v_ref, kmask_ref, qmask_ref,
                        out_ref, *attn_refs, scale, matmul_dtype, exact_recip):
    """One (batch, q-tile) block of masked scaled dot-product attention."""
    q = q_ref[0]                              # (bq, Dq), input dtype (f32)
    if scale is not None:
        q = q * scale                         # fold scale into q (f32, pre-cast)
    q = q.astype(matmul_dtype)
    k = k_ref[0]                              # (Lk, Dk), already matmul_dtype
    kmask = kmask_ref[0]                      # (1,  Lk)  >0 => masked key
    qmask = qmask_ref[0]                      # (bq, 1)   >0 => masked query row

    # q @ k^T without materializing a transpose: contract the last dims.
    att = jax.lax.dot_general(q, k, (((1,), (1,)), ((), ())),
                              preferred_element_type=jnp.float32)   # (bq, Lk) f32
    att = jnp.where(kmask > 0, -jnp.inf, att)        # masked_fill(attn_mask, -inf)

    # softmax over the key axis (f32).  Note: a fully masked query row yields
    # NaN, matching PyTorch's -inf masked_fill + softmax behavior.
    m = jnp.max(att, axis=-1, keepdims=True)
    e = jnp.exp(att - m)
    s = jnp.sum(e, axis=-1, keepdims=True)
    if exact_recip:
        inv = 1.0 / s                                # exact: returned attn sums to 1
    else:
        inv = pl.reciprocal(s, approx=True)          # EUP slot (out-only fast path)
    attn = e * inv
    attn = jnp.where(qmask > 0, 0.0, attn)           # masked_fill(softmax_mask, 0)
    # dropout(p=0.0) -> identity
    # TODO(synk): stochastic dropout (attention_dropout > 0, training mode) not implemented.

    out = jnp.dot(attn.astype(matmul_dtype), v_ref[0],
                  preferred_element_type=jnp.float32)

    out_ref[0] = out.astype(out_ref.dtype)
    if attn_refs:
        attn_refs[0][0] = attn.astype(attn_refs[0].dtype)


def _pick_block_q(Lq, Lk, Dq, Dk, Dv, qb, kb, vb, ob, ab, requested, budget_bytes):
    """Largest block_q dividing Lq whose double-buffered footprint fits budget."""
    def footprint(bq):
        per_step = (bq * Dq * qb + Lk * Dk * kb + Lk * Dv * vb   # q tile, K, V
                    + Lk * 4 + bq * 4                            # masks
                    + bq * Dv * ob + bq * Lk * ab)               # out (+ attn) tiles
        return 2 * per_step                                      # double buffering
    cap = min(requested if requested is not None else 512, Lq)
    cands = sorted({b for b in (cap, 1024, 512, 256, 128, 64, 32, 16, 8)
                    if 0 < b <= cap and Lq % b == 0}, reverse=True)
    if not cands:
        return Lq, footprint(Lq)
    for b in cands:
        if footprint(b) <= budget_bytes:
            return b, footprint(b)
    b = cands[-1]
    return b, footprint(b)


def masked_sdpa(q, k, v, *, scale=None, key_mask=None, query_mask=None,
                block_q=None, matmul_dtype=None, return_attn=True,
                attn_dtype=jnp.float32):
    """MaskedScaledDotProductAttention.forward.

    q: (B, Lq, Dq), k: (B, Lk, Dk), v: (B, Lk, Dv)
    key_mask:   (B, Lk) bool/float, True/>0 => key position masked (attn_mask)
    query_mask: (B, Lq) bool/float, True/>0 => query row masked    (softmax_mask)
    matmul_dtype: dtype fed to the MXU (e.g. jnp.bfloat16 on v6e/v7x); softmax
                  and masking stay in f32.
    return_attn:  if False, only `out` is returned and the O(Lq*Lk) attention
                  writeback (the dominant HBM stream) is skipped.
    attn_dtype:   dtype of the returned attention (bf16 halves its writeback).

    Returns (out, attn) if return_attn else out.

    Megacore note: the grid is (B, Lq//block_q) with K/V resident across the
    q-tile axis; on v7x fold heads into B so B >= 2 and the two TensorCores
    split batches (each with its own K/V) rather than re-reading K/V.
    """
    B, Lq, Dq = q.shape
    _, Lk, Dk = k.shape
    _, Lv, Dv = v.shape
    assert Lk == Lv and Dq == Dk

    if matmul_dtype is None:
        matmul_dtype = q.dtype
    # K/V are resident across q-tiles: cast ONCE at the boundary, not per step.
    k = k.astype(matmul_dtype)
    v = v.astype(matmul_dtype)

    if key_mask is None:
        key_mask = jnp.zeros((B, Lk), jnp.float32)
    if query_mask is None:
        query_mask = jnp.zeros((B, Lq), jnp.float32)
    # explicit singleton dims so the (8,128)-tiling rule is trivially satisfied
    key_mask = key_mask.astype(jnp.float32).reshape(B, 1, Lk)
    query_mask = query_mask.astype(jnp.float32).reshape(B, Lq, 1)

    qb = jnp.dtype(q.dtype).itemsize
    kb = jnp.dtype(matmul_dtype).itemsize
    ob = jnp.dtype(q.dtype).itemsize
    ab = jnp.dtype(attn_dtype).itemsize if return_attn else 0

    # Pick the largest q tile whose double-buffered footprint fits a budget
    # safe for v7x's 64 MiB VMEM (v6e/v5e simply get the same or larger tile).
    block_q, blocks_bytes = _pick_block_q(Lq, Lk, Dq, Dk, Dv, qb, kb, kb, ob, ab,
                                          requested=block_q,
                                          budget_bytes=44 << 20)
    assert Lq % block_q == 0
    grid = (B, Lq // block_q)

    # Explicit scoped-VMEM limit sized from the actual blocks (+30% headroom),
    # clamped to [32 MiB default, 64 MiB] so it is valid on every generation.
    vmem_limit = int(min(64 << 20, max(32 << 20, int(blocks_bytes * 1.3))))

    # Advisory cost estimate: 2 matmuls + the exp pass + all HBM streams.
    flops = 4 * B * Lq * Lk * Dq
    transcendentals = B * Lq * Lk
    bytes_accessed = (B * Lq * Dq * qb + B * Lk * Dk * kb + B * Lk * Dv * kb
                      + B * Lk * 4 + B * Lq * 4
                      + B * Lq * Dv * ob + B * Lq * Lk * ab)
    cost = pl.CostEstimate(flops=flops, transcendentals=transcendentals,
                           bytes_accessed=bytes_accessed)

    kernel = functools.partial(_masked_sdpa_kernel, scale=scale,
                               matmul_dtype=matmul_dtype,
                               exact_recip=return_attn)

    in_specs = [
        pl.BlockSpec((1, block_q, Dq), lambda b, i: (b, i, 0)),   # q tile
        pl.BlockSpec((1, Lk, Dk),      lambda b, i: (b, 0, 0)),   # k (full keys, resident)
        pl.BlockSpec((1, Lk, Dv),      lambda b, i: (b, 0, 0)),   # v (full keys, resident)
        pl.BlockSpec((1, 1, Lk),       lambda b, i: (b, 0, 0)),   # key padding mask
        pl.BlockSpec((1, block_q, 1),  lambda b, i: (b, i, 0)),   # query padding mask
    ]
    # TODO(synk): if Dv < 128 per head, fold heads into Dv in the caller for a
    # lane-dense `out` tile (avoids masked vst.msk partial stores).
    out_spec = pl.BlockSpec((1, block_q, Dv), lambda b, i: (b, i, 0))

    if return_attn:
        out_shape = (jax.ShapeDtypeStruct((B, Lq, Dv), q.dtype),
                     jax.ShapeDtypeStruct((B, Lq, Lk), attn_dtype))
        out_specs = (out_spec,
                     pl.BlockSpec((1, block_q, Lk), lambda b, i: (b, i, 0)))
    else:
        out_shape = jax.ShapeDtypeStruct((B, Lq, Dv), q.dtype)
        out_specs = out_spec

    return pl.pallas_call(
        kernel,
        out_shape=out_shape,
        grid=grid,
        in_specs=in_specs,
        out_specs=out_specs,
        compiler_params=pltpu.CompilerParams(
            dimension_semantics=("parallel", "parallel"),
            vmem_limit_bytes=vmem_limit),
        cost_estimate=cost,
    )(q, k, v, key_mask, query_mask)


# ---------- pure-JAX reference (PyTorch semantics, dense masks) ----------
def _ref_masked_sdpa(q, k, v, scale, key_mask, query_mask):
    att = jnp.einsum('bqd,bkd->bqk', q, k)
    if scale is not None:
        att = att * scale
    att = jnp.where(key_mask[:, None, :] > 0, -jnp.inf, att)
    att = jax.nn.softmax(att, axis=-1)
    att = jnp.where(query_mask[:, :, None] > 0, 0.0, att)
    out = jnp.einsum('bqk,bkd->bqd', att, v)
    return out, att


if __name__ == "__main__":
    B, L, D = 2, 8, 32

    key = jax.random.PRNGKey(0)
    kq, kk, kv = jax.random.split(key, 3)
    q = jax.random.normal(kq, (B, L, D), jnp.float32)
    k = jax.random.normal(kk, (B, L, D), jnp.float32)
    v = jax.random.normal(kv, (B, L, D), jnp.float32)
    # zero-padded tail positions so both masks are exercised (never all-masked)
    q = q.at[0, -1, :].set(0.0)
    k = k.at[0, -1, :].set(0.0)
    v = v.at[0, -1, :].set(0.0)

    scale = float(D) ** -0.5
    key_mask = (jnp.sum(k, axis=-1) == 0.0)      # (B, L) True => padded key
    query_mask = (jnp.sum(q, axis=-1) == 0.0)    # (B, L) True => padded query

    ref_out, ref_attn = _ref_masked_sdpa(
        q, k, v, scale, key_mask.astype(jnp.float32), query_mask.astype(jnp.float32))

    # 1) full path: f32 matmuls, f32 attention returned (exact reciprocal)
    out, attn = masked_sdpa(q, k, v, scale=scale,
                            key_mask=key_mask, query_mask=query_mask)
    out = jax.block_until_ready(out)
    assert out.shape == (B, L, D) and attn.shape == (B, L, L)
    assert jnp.allclose(out, ref_out, atol=1e-4, rtol=1e-4), \
        float(jnp.max(jnp.abs(out - ref_out)))
    assert jnp.allclose(attn, ref_attn, atol=1e-4, rtol=1e-4), \
        float(jnp.max(jnp.abs(attn - ref_attn)))
    # returned attention rows for non-masked queries sum to ~1 (exact reciprocal)
    row_sums = jnp.sum(attn, axis=-1)
    valid = query_mask.astype(jnp.float32) == 0.0
    assert bool(jnp.all(jnp.where(valid, jnp.abs(row_sums - 1.0) < 1e-4, True)))

    # 2) out-only fast path: no attention writeback, approx EUP reciprocal
    out_only = masked_sdpa(q, k, v, scale=scale,
                           key_mask=key_mask, query_mask=query_mask,
                           return_attn=False)
    out_only = jax.block_until_ready(out_only)
    assert out_only.shape == (B, L, D)
    assert jnp.allclose(out_only, ref_out, atol=5e-3, rtol=5e-3), \
        float(jnp.max(jnp.abs(out_only - ref_out)))

    # 3) bf16-MXU + bf16 attention writeback (v6e/v7x fast path)
    out_bf16, attn_bf16 = masked_sdpa(q, k, v, scale=scale,
                                      key_mask=key_mask, query_mask=query_mask,
                                      matmul_dtype=jnp.bfloat16,
                                      attn_dtype=jnp.bfloat16)
    out_bf16 = jax.block_until_ready(out_bf16)
    assert out_bf16.shape == (B, L, D) and attn_bf16.dtype == jnp.bfloat16
    assert bool(jnp.all(jnp.isfinite(out_bf16)))
    assert jnp.allclose(out_bf16, ref_out, atol=3e-2, rtol=3e-2), \
        float(jnp.max(jnp.abs(out_bf16 - ref_out)))
    assert jnp.allclose(attn_bf16.astype(jnp.float32), ref_attn, atol=3e-2, rtol=3e-2), \
        float(jnp.max(jnp.abs(attn_bf16.astype(jnp.float32) - ref_attn)))

    print("KERNEL_OK")
</pallas_src>

<mosaic_0001>
module attributes {stable_mosaic.version = 11 : i64} {
  func.func @_masked_sdpa_kernel(%arg0: i32, %arg1: i32, %arg2: memref<1x8x32xf32, #tpu.memory_space<vmem>>, %arg3: memref<1x8x32xf32, #tpu.memory_space<vmem>>, %arg4: memref<1x8x32xf32, #tpu.memory_space<vmem>>, %arg5: memref<1x1x8xf32, #tpu.memory_space<vmem>>, %arg6: memref<1x8x1xf32, #tpu.memory_space<vmem>>, %arg7: memref<1x8x32xf32, #tpu.memory_space<vmem>>, %arg8: memref<1x8x8xf32, #tpu.memory_space<vmem>>) attributes {dimension_semantics = [#tpu.dimension_semantics<parallel>, #tpu.dimension_semantics<parallel>], iteration_bounds = array<i64: 2, 1>, scalar_prefetch = 0 : i64, scratch_operands = 0 : i64, tpu.core_type = #tpu.core_type<tc>, window_params = [{transform_indices = @transform_0, window_bounds = array<i64: 1, 8, 32>}, {transform_indices = @transform_1, window_bounds = array<i64: 1, 8, 32>}, {transform_indices = @transform_2, window_bounds = array<i64: 1, 8, 32>}, {transform_indices = @transform_3, window_bounds = array<i64: 1, 1, 8>}, {transform_indices = @transform_4, window_bounds = array<i64: 1, 8, 1>}, {transform_indices = @transform_5, window_bounds = array<i64: 1, 8, 32>}, {transform_indices = @transform_6, window_bounds = array<i64: 1, 8, 8>}]} {
    %c0 = arith.constant 0 : index
    %c0_0 = arith.constant 0 : index
    %c0_1 = arith.constant 0 : index
    %0 = vector.load %arg2[%c0, %c0_0, %c0_1] : memref<1x8x32xf32, #tpu.memory_space<vmem>>, vector<1x8x32xf32>
    %1 = vector.shape_cast %0 : vector<1x8x32xf32> to vector<8x32xf32>
    %cst = arith.constant 0.176776692 : f32
    %2 = vector.broadcast %cst : f32 to vector<8x32xf32>
    %3 = arith.mulf %1, %2 : vector<8x32xf32>
    %c0_2 = arith.constant 0 : index
    %c0_3 = arith.constant 0 : index
    %c0_4 = arith.constant 0 : index
    %4 = vector.load %arg3[%c0_2, %c0_3, %c0_4] : memref<1x8x32xf32, #tpu.memory_space<vmem>>, vector<1x8x32xf32>
    %5 = vector.shape_cast %4 : vector<1x8x32xf32> to vector<8x32xf32>
    %c0_5 = arith.constant 0 : index
    %c0_6 = arith.constant 0 : index
    %c0_7 = arith.constant 0 : index
    %6 = vector.load %arg5[%c0_5, %c0_6, %c0_7] : memref<1x1x8xf32, #tpu.memory_space<vmem>>, vector<1x1x8xf32>
    %7 = vector.shape_cast %6 : vector<1x1x8xf32> to vector<1x8xf32>
    %c0_8 = arith.constant 0 : index
    %c0_9 = arith.constant 0 : index
    %c0_10 = arith.constant 0 : index
    %8 = vector.load %arg6[%c0_8, %c0_9, %c0_10] : memref<1x8x1xf32, #tpu.memory_space<vmem>>, vector<1x8x1xf32>
    %9 = vector.shape_cast %8 : vector<1x8x1xf32> to vector<8x1xf32>
    %cst_11 = arith.constant dense<0.000000e+00> : vector<8x8xf32>
    %10 = tpu.matmul %3, %5, %cst_11 {dimension_numbers = #tpu.dot_dimension_numbers<[1], [1], [0], [0], [0, 0, 1, 0], [], []>} : vector<8x32xf32>, vector<8x32xf32>, vector<8x8xf32> -> vector<8x8xf32>
    %cst_12 = arith.constant 0.000000e+00 : f32
    %11 = vector.broadcast %cst_12 : f32 to vector<1x8xf32>
    %12 = arith.cmpf ogt, %7, %11 : vector<1x8xf32>
    %cst_13 = arith.constant 0xFF800000 : f32
    %13 = vector.shape_cast %12 : vector<1x8xi1> to vector<1x8xi1>
    %14 = vector.broadcast %13 : vector<1x8xi1> to vector<8x8xi1>
    %15 = vector.broadcast %cst_13 : f32 to vector<8x8xf32>
    %16 = arith.select %14, %15, %10 : vector<8x8xi1>, vector<8x8xf32>
    %cst_14 = arith.constant dense<0xFF800000> : vector<8xf32>
    %17 = vector.multi_reduction <maximumf>, %16, %cst_14 [1] : vector<8x8xf32> to vector<8xf32>
    %18 = vector.shape_cast %17 : vector<8xf32> to vector<8x1xf32>
    %19 = vector.broadcast %18 : vector<8x1xf32> to vector<8x8xf32>
    %20 = arith.subf %16, %19 : vector<8x8xf32>
    %21 = math.exp %20 : vector<8x8xf32>
    %cst_15 = arith.constant dense<0.000000e+00> : vector<8xf32>
    %22 = vector.multi_reduction <add>, %21, %cst_15 [1] : vector<8x8xf32> to vector<8xf32>
    %23 = vector.shape_cast %22 : vector<8xf32> to vector<8x1xf32>
    %cst_16 = arith.constant 1.000000e+00 : f32
    %24 = vector.broadcast %cst_16 : f32 to vector<8x1xf32>
    %25 = arith.divf %24, %23 : vector<8x1xf32>
    %26 = vector.broadcast %25 : vector<8x1xf32> to vector<8x8xf32>
    %27 = arith.mulf %21, %26 : vector<8x8xf32>
    %cst_17 = arith.constant 0.000000e+00 : f32
    %28 = vector.broadcast %cst_17 : f32 to vector<8x1xf32>
    %29 = arith.cmpf ogt, %9, %28 : vector<8x1xf32>
    %cst_18 = arith.constant 0.000000e+00 : f32
    %30 = vector.shape_cast %29 : vector<8x1xi1> to vector<8x1xi1>
    %31 = vector.broadcast %30 : vector<8x1xi1> to vector<8x8xi1>
    %32 = vector.broadcast %cst_18 : f32 to vector<8x8xf32>
    %33 = arith.select %31, %32, %27 : vector<8x8xi1>, vector<8x8xf32>
    %c0_19 = arith.constant 0 : index
    %c0_20 = arith.constant 0 : index
    %c0_21 = arith.constant 0 : index
    %34 = vector.load %arg4[%c0_19, %c0_20, %c0_21] : memref<1x8x32xf32, #tpu.memory_space<vmem>>, vector<1x8x32xf32>
    %35 = vector.shape_cast %34 : vector<1x8x32xf32> to vector<8x32xf32>
    %cst_22 = arith.constant dense<0.000000e+00> : vector<8x32xf32>
    %36 = tpu.matmul %33, %35, %cst_22 {dimension_numbers = #tpu.dot_dimension_numbers<[1], [0], [0], [1], [0, 0, 1, 1], [], []>} : vector<8x8xf32>, vector<8x32xf32>, vector<8x32xf32> -> vector<8x32xf32>
    %c0_23 = arith.constant 0 : index
    %c0_24 = arith.constant 0 : index
    %c0_25 = arith.constant 0 : index
    %37 = vector.load %arg7[%c0_23, %c0_24, %c0_25] : memref<1x8x32xf32, #tpu.memory_space<vmem>>, vector<1x8x32xf32>
    %38 = vector.shape_cast %37 : vector<1x8x32xf32> to vector<8x32xf32>
    %39 = vector.shape_cast %36 : vector<8x32xf32> to vector<1x8x32xf32>
    tpu.vector_store %arg7[%c0_23, %c0_24, %c0_25], %39 {strides = array<i32>} : memref<1x8x32xf32, #tpu.memory_space<vmem>>, vector<1x8x32xf32>,
    %c0_26 = arith.constant 0 : index
    %c0_27 = arith.constant 0 : index
    %c0_28 = arith.constant 0 : index
    %40 = vector.load %arg8[%c0_26, %c0_27, %c0_28] : memref<1x8x8xf32, #tpu.memory_space<vmem>>, vector<1x8x8xf32>
    %41 = vector.shape_cast %40 : vector<1x8x8xf32> to vector<8x8xf32>
    %42 = vector.shape_cast %33 : vector<8x8xf32> to vector<1x8x8xf32>
    tpu.vector_store %arg8[%c0_26, %c0_27, %c0_28], %42 {strides = array<i32>} : memref<1x8x8xf32, #tpu.memory_space<vmem>>, vector<1x8x8xf32>,
    return
  }
  func.func @transform_0(%arg0: i32, %arg1: i32) -> (i32, i32, i32) {
    %c0_i32 = arith.constant 0 : i32
    %c0_i32_0 = arith.constant 0 : i32
    return %arg0, %arg1, %c0_i32 : i32, i32, i32
  }
  func.func @transform_1(%arg0: i32, %arg1: i32) -> (i32, i32, i32) {
    %c0_i32 = arith.constant 0 : i32
    %c0_i32_0 = arith.constant 0 : i32
    %c0_i32_1 = arith.constant 0 : i32
    return %arg0, %c0_i32, %c0_i32_0 : i32, i32, i32
  }
  func.func @transform_2(%arg0: i32, %arg1: i32) -> (i32, i32, i32) {
    %c0_i32 = arith.constant 0 : i32
    %c0_i32_0 = arith.constant 0 : i32
    %c0_i32_1 = arith.constant 0 : i32
    return %arg0, %c0_i32, %c0_i32_0 : i32, i32, i32
  }
  func.func @transform_3(%arg0: i32, %arg1: i32) -> (i32, i32, i32) {
    %c0_i32 = arith.constant 0 : i32
    %c0_i32_0 = arith.constant 0 : i32
    %c0_i32_1 = arith.constant 0 : i32
    return %arg0, %c0_i32, %c0_i32_0 : i32, i32, i32
  }
  func.func @transform_4(%arg0: i32, %arg1: i32) -> (i32, i32, i32) {
    %c0_i32 = arith.constant 0 : i32
    %c0_i32_0 = arith.constant 0 : i32
    return %arg0, %arg1, %c0_i32 : i32, i32, i32
  }
  func.func @transform_5(%arg0: i32, %arg1: i32) -> (i32, i32, i32) {
    %c0_i32 = arith.constant 0 : i32
    %c0_i32_0 = arith.constant 0 : i32
    return %arg0, %arg1, %c0_i32 : i32, i32, i32
  }
  func.func @transform_6(%arg0: i32, %arg1: i32) -> (i32, i32, i32) {
    %c0_i32 = arith.constant 0 : i32
    %c0_i32_0 = arith.constant 0 : i32
    return %arg0, %arg1, %c0_i32 : i32, i32, i32
  }
}

</mosaic_0001>

<llo_original>
// kernel: tpu_custom_call.1
$region0: #{tpu_custom_call.1}
  #allocation0 [shape = 'u32[]', space=smem, size = 0x4, offset = 0x4, fixed_abs, tag = 'smem constant byte address 0x4 - core index']
  #allocation1 [shape = 'u32[144,128]{1,0:T(1,128)}', space=vmem, size = 0x12000, scoped, tag = 'internal scratch']
  %s0 = inlined_call_operand.vmem [shape: f32[2,8,32], index: 0, kind: input, shape index: {}]
  %s1 = inlined_call_operand.hbm [shape: f32[2,8,32], index: 1, kind: input, shape index: {}]
  %s2 = inlined_call_operand.hbm [shape: f32[2,8,32], index: 2, kind: input, shape index: {}]
  %s3 = inlined_call_operand.vmem [shape: f32[2,1,8], index: 3, kind: input, shape index: {}]
  %s4 = inlined_call_operand.vmem [shape: f32[2,8,1], index: 4, kind: input, shape index: {}]
  %s5 = inlined_call_operand.hbm [shape: f32[2,8,32], index: 5, kind: output, shape index: {0}]
  %s6 = inlined_call_operand.hbm [shape: f32[2,8,8], index: 6, kind: output, shape index: {1}]
  %7 = xla_tuple %s5, %s6
  %s8 = sld [smem:[#allocation0]]
  $region69: #{tpu_custom_call.1} parent=0
    _
  %s10 = ssub.s32 1, %s8
  %s11 = scalar_select 0, %s10, %s8
  $region1: #{tpu_custom_call.1} parent=0
    #allocation2 [shape = 'u8[8192]{0}', space=vmem, size = 0x2000, scoped, tag = 'input window, operand 1']
    #allocation3 [shape = 's32[2]{0}', space=sflag, size = 0x8, scoped, tag = 'scoped memory for tpu_custom_call.1']
    #allocation4 [shape = 's32[2]{0}', space=sflag, size = 0x8, scoped, tag = 'scoped memory for tpu_custom_call.1']
    #allocation5 [shape = 'u8[8192]{0}', space=vmem, size = 0x2000, scoped, tag = 'input window, operand 2']
    #allocation6 [shape = 's32[2]{0}', space=sflag, size = 0x8, scoped, tag = 'scoped memory for tpu_custom_call.1']
    #allocation7 [shape = 'u8[8192]{0}', space=vmem, size = 0x2000, scoped, tag = 'output window, operand 0']
    #allocation8 [shape = 'u8[8192]{0}', space=vmem, size = 0x2000, scoped, tag = 'output window, operand 1']
    #allocation9 [shape = 's32[2]{0}', space=sflag, size = 0x8, scoped, tag = 'scoped memory for tpu_custom_call.1']
    %12 = vsyncpa [#allocation3], 0
    %s13 = scalar_lea.sflag [#allocation3], 1
    %14 = vsyncpa %s13, 0
    %15 = vsyncpa [#allocation6], 0
    %s16 = scalar_lea.sflag [#allocation6], 1
    %17 = vsyncpa %s16, 0
    %18 = vsyncpa [#allocation4], 0
    %s19 = scalar_lea.sflag [#allocation4], 1
    %20 = vsyncpa %s19, 0
    %21 = vsyncpa [#allocation9], 0
    %s22 = scalar_lea.sflag [#allocation9], 1
    %23 = vsyncpa %s22, 0
    loop: start=0, step=1, limit=4
    $region2: #{tpu_custom_call.1} parent=1 // loop_pre_header
      _
    $region3: #{tpu_custom_call.1} parent=1 // loop_header
      %s25 = sphi 0, %s29
      %p26 = scmp.ge.s32.totalorder %s25, 4
      %s32 = sphi 0, %s44
      %s33 = sphi 0, %s40
      %s34 = sphi 0, %s32
      %s35 = sphi 0, %s33
      %s36 = sphi 0, %s34
      %s37 = sphi 0, %s35
      %s49 = sphi 0, %s51
      %s52 = sphi 0, %s49
      %s53 = sphi 0, %s52
      %s69 = sphi 0, %s53
      %s75 = sphi 0, %s77
      %s78 = sphi 0, %s75
      %s79 = sphi 0, %s78
      %s95 = sphi 0, %s79
      %s101 = sphi 0, %s103
      %s104 = sphi 0, %s101
      %s105 = sphi 0, %s104
      %s121 = sphi 0, %s105
      %s127 = sphi 0, %s129
      %s130 = sphi 0, %s127
      %s131 = sphi 0, %s130
      %s147 = sphi 0, %s131
      %s155 = sphi 0, %s157
      %s158 = sphi 0, %s155
      %s159 = sphi 0, %s158
      %s175 = sphi 0, %s159
      %s183 = sphi 0, %s185
      %s186 = sphi 0, %s183
      %s187 = sphi 0, %s186
      %s203 = sphi 0, %s187
      %s211 = sphi 0, %s213
      %s214 = sphi 0, %s211
      %s215 = sphi 0, %s214
      %s231 = sphi 0, %s215
    $region4: #{tpu_custom_call.1} parent=1 // loop_header_branch
      %28 = sbr.rel (%p26) target = $region8
    $region5: #{tpu_custom_call.1} parent=1 // loop_body
      %s30 = ssub.s32 %s25, 1
      %s31 = ssub.s32 %s25, 2
      %s38 = sadd.s32 1, %s33
      %p39 = scmp.ge.s32.totalorder %s38, 1
      %s40 = scalar_select %p39, 0, %s38
      %s41 = sadd.s32 1, %s32
      %s42 = scalar_select %p39, %s41, %s32
      %p43 = scmp.ge.s32.totalorder %s42, 2
      %s44 = scalar_select %p43, 0, %s42
      %s45 = ssub.s32 %s32, %s44
      %s46 = ssub.s32 %s33, %s40
      %s47 = sor.u32 %s45, %s46
      %p48 = scmp.eq.s32.totalorder %s47, 0
      %s50 = sadd.s32 %s49, 1
      %s51 = scalar_select %p48, %s49, %s50
      %p54 = pneg %p48
      %p55 = scmp.eq.s32.totalorder %s25, 1
      %p56 = por %p54, %p55
      %p57 = scmp.ne.s32.totalorder %s49, %s52
      %p58 = scmp.eq.s32.totalorder %s25, 0
      %p59 = por %p57, %p58
      %p60 = scmp.ne.s32.totalorder %s49, %s52
      %p61 = scmp.eq.s32.totalorder %s30, 1
      %p62 = por %p60, %p61
      %p63 = scmp.ne.s32.totalorder %s52, %s53
      %p64 = scmp.eq.s32.totalorder %s30, 0
      %p65 = por %p63, %p64
      %p66 = scmp.ne.s32.totalorder %s52, %s53
      %p67 = scmp.eq.s32.totalorder %s31, 1
      %p68 = por %p66, %p67
      %p70 = scmp.ne.s32.totalorder %s53, %s69
      %p71 = scmp.eq.s32.totalorder %s31, 0
      %p72 = por %p70, %p71
      %s73 = ssub.s32 %s32, %s44
      %p74 = scmp.eq.s32.totalorder %s73, 0
      %s76 = sadd.s32 %s75, 1
      %s77 = scalar_select %p74, %s75, %s76
      %p80 = pneg %p74
      %p81 = scmp.eq.s32.totalorder %s25, 1
      %p82 = por %p80, %p81
      %p83 = scmp.ne.s32.totalorder %s75, %s78
      %p84 = scmp.eq.s32.totalorder %s25, 0
      %p85 = por %p83, %p84
      %p86 = scmp.ne.s32.totalorder %s75, %s78
      %p87 = scmp.eq.s32.totalorder %s30, 1
      %p88 = por %p86, %p87
      %p89 = scmp.ne.s32.totalorder %s78, %s79
      %p90 = scmp.eq.s32.totalorder %s30, 0
      %p91 = por %p89, %p90
      %p92 = scmp.ne.s32.totalorder %s78, %s79
      %p93 = scmp.eq.s32.totalorder %s31, 1
      %p94 = por %p92, %p93
      %p96 = scmp.ne.s32.totalorder %s79, %s95
      %p97 = scmp.eq.s32.totalorder %s31, 0
      %p98 = por %p96, %p97
      %s99 = ssub.s32 %s32, %s44
      %p100 = scmp.eq.s32.totalorder %s99, 0
      %s102 = sadd.s32 %s101, 1
      %s103 = scalar_select %p100, %s101, %s102
      %p106 = pneg %p100
      %p107 = scmp.eq.s32.totalorder %s25, 1
      %p108 = por %p106, %p107
      %p109 = scmp.ne.s32.totalorder %s101, %s104
      %p110 = scmp.eq.s32.totalorder %s25, 0
      %p111 = por %p109, %p110
      %p112 = scmp.ne.s32.totalorder %s101, %s104
      %p113 = scmp.eq.s32.totalorder %s30, 1
      %p114 = por %p112, %p113
      %p115 = scmp.ne.s32.totalorder %s104, %s105
      %p116 = scmp.eq.s32.totalorder %s30, 0
      %p117 = por %p115, %p116
      %p118 = scmp.ne.s32.totalorder %s104, %s105
      %p119 = scmp.eq.s32.totalorder %s31, 1
      %p120 = por %p118, %p119
      %p122 = scmp.ne.s32.totalorder %s105, %s121
      %p123 = scmp.eq.s32.totalorder %s31, 0
      %p124 = por %p122, %p123
      %s125 = ssub.s32 %s32, %s44
      %p126 = scmp.eq.s32.totalorder %s125, 0
      %s128 = sadd.s32 %s127, 1
      %s129 = scalar_select %p126, %s127, %s128
      %p132 = pneg %p126
      %p133 = scmp.eq.s32.totalorder %s25, 1
      %p134 = por %p132, %p133
      %p135 = scmp.ne.s32.totalorder %s127, %s130
      %p136 = scmp.eq.s32.totalorder %s25, 0
      %p137 = por %p135, %p136
      %p138 = scmp.ne.s32.totalorder %s127, %s130
      %p139 = scmp.eq.s32.totalorder %s30, 1
      %p140 = por %p138, %p139
      %p141 = scmp.ne.s32.totalorder %s130, %s131
      %p142 = scmp.eq.s32.totalorder %s30, 0
      %p143 = por %p141, %p142
      %p144 = scmp.ne.s32.totalorder %s130, %s131
      %p145 = scmp.eq.s32.totalorder %s31, 1
      %p146 = por %p144, %p145
      %p148 = scmp.ne.s32.totalorder %s131, %s147
      %p149 = scmp.eq.s32.totalorder %s31, 0
      %p150 = por %p148, %p149
      %s151 = ssub.s32 %s32, %s44
      %s152 = ssub.s32 %s33, %s40
      %s153 = sor.u32 %s151, %s152
      %p154 = scmp.eq.s32.totalorder %s153, 0
      %s156 = sadd.s32 %s155, 1
      %s157 = scalar_select %p154, %s155, %s156
      %p160 = pneg %p154
      %p161 = scmp.eq.s32.totalorder %s25, 1
      %p162 = por %p160, %p161
      %p163 = scmp.ne.s32.totalorder %s155, %s158
      %p164 = scmp.eq.s32.totalorder %s25, 0
      %p165 = por %p163, %p164
      %p166 = scmp.ne.s32.totalorder %s155, %s158
      %p167 = scmp.eq.s32.totalorder %s30, 1
      %p168 = por %p166, %p167
      %p169 = scmp.ne.s32.totalorder %s158, %s159
      %p170 = scmp.eq.s32.totalorder %s30, 0
      %p171 = por %p169, %p170
      %p172 = scmp.ne.s32.totalorder %s158, %s159
      %p173 = scmp.eq.s32.totalorder %s31, 1
      %p174 = por %p172, %p173
      %p176 = scmp.ne.s32.totalorder %s159, %s175
      %p177 = scmp.eq.s32.totalorder %s31, 0
      %p178 = por %p176, %p177
      %s179 = ssub.s32 %s32, %s44
      %s180 = ssub.s32 %s33, %s40
      %s181 = sor.u32 %s179, %s180
      %p182 = scmp.eq.s32.totalorder %s181, 0
      %s184 = sadd.s32 %s183, 1
      %s185 = scalar_select %p182, %s183, %s184
      %p188 = pneg %p182
      %p189 = scmp.eq.s32.totalorder %s25, 1
      %p190 = por %p188, %p189
      %p191 = scmp.ne.s32.totalorder %s183, %s186
      %p192 = scmp.eq.s32.totalorder %s25, 0
      %p193 = por %p191, %p192
      %p194 = scmp.ne.s32.totalorder %s183, %s186
      %p195 = scmp.eq.s32.totalorder %s30, 1
      %p196 = por %p194, %p195
      %p197 = scmp.ne.s32.totalorder %s186, %s187
      %p198 = scmp.eq.s32.totalorder %s30, 0
      %p199 = por %p197, %p198
      %p200 = scmp.ne.s32.totalorder %s186, %s187
      %p201 = scmp.eq.s32.totalorder %s31, 1
      %p202 = por %p200, %p201
      %p204 = scmp.ne.s32.totalorder %s187, %s203
      %p205 = scmp.eq.s32.totalorder %s31, 0
      %p206 = por %p204, %p205
      %s207 = ssub.s32 %s32, %s44
      %s208 = ssub.s32 %s33, %s40
      %s209 = sor.u32 %s207, %s208
      %p210 = scmp.eq.s32.totalorder %s209, 0
      %s212 = sadd.s32 %s211, 1
      %s213 = scalar_select %p210, %s211, %s212
      %p216 = pneg %p210
      %p217 = scmp.eq.s32.totalorder %s25, 1
      %p218 = por %p216, %p217
      %p219 = scmp.ne.s32.totalorder %s211, %s214
      %p220 = scmp.eq.s32.totalorder %s25, 0
      %p221 = por %p219, %p220
      %p222 = scmp.ne.s32.totalorder %s211, %s214
      %p223 = scmp.eq.s32.totalorder %s30, 1
      %p224 = por %p222, %p223
      %p225 = scmp.ne.s32.totalorder %s214, %s215
      %p226 = scmp.eq.s32.totalorder %s30, 0
      %p227 = por %p225, %p226
      %p228 = scmp.ne.s32.totalorder %s214, %s215
      %p229 = scmp.eq.s32.totalorder %s31, 1
      %p230 = por %p228, %p229
      %p232 = scmp.ne.s32.totalorder %s215, %s231
      %p233 = scmp.eq.s32.totalorder %s31, 0
      %p234 = por %p232, %p233
      %p235 = scmp.le.s32.totalorder 1, %s25
      %p236 = scmp.lt.s32.totalorder %s25, 3
      %p237 = pnand %p235, %p236
      %p238 = pneg %p237
      // Predicated region
      $region9: #{tpu_custom_call.1} parent=5 // pred_check
        _
      $region10: #{tpu_custom_call.1} parent=5 // pred_check_branch
        %240 = sbr.rel (%p237) target = $region12
      $region11: #{tpu_custom_call.1} parent=5 // pred_region
        %s241 = ssub.s32 %s25, 1
      $region12: #{tpu_custom_call.1} parent=5 // pred_fallthru
        _
      %p242 = scmp.lt.s32.totalorder %s25, 2
      // Predicated region
      $region13: #{tpu_custom_call.1} parent=5 // pred_check
        %p243 = pneg %p242
      $region14: #{tpu_custom_call.1} parent=5 // pred_check_branch
        %245 = sbr.rel (%p243) target = $region16
      $region15: #{tpu_custom_call.1} parent=5 // pred_region
        // Predicated region
        $region17: #{tpu_custom_call.1} parent=15 // pred_check
          %p246 = pneg %p59
        $region18: #{tpu_custom_call.1} parent=15 // pred_check_branch
          %248 = sbr.rel (%p246) target = $region20
        $region19: #{tpu_custom_call.1} parent=15 // pred_region
          %p249 = scmp.lt.s32.totalorder %s32, 1
          %s250 = scalar_select %p249, %s32, 1
          %p251 = scmp.lt.s32.totalorder %s33, 0
          %s252 = scalar_select %p251, %s33, 0
          %s253 = sadd.s32 %s252, %s250
          %s254 = smul.addr %s253, 8
          %s255 = scalar_lea.vmem %s0, %s254
        $region20: #{tpu_custom_call.1} parent=15 // pred_fallthru
          _
        // Predicated region
        $region21: #{tpu_custom_call.1} parent=15 // pred_check
          %p256 = pneg %p85
        $region22: #{tpu_custom_call.1} parent=15 // pred_check_branch
          %258 = sbr.rel (%p256) target = $region24
        $region23: #{tpu_custom_call.1} parent=15 // pred_region
          %s259 = sand.u32 %s75, 1
          %s260 = scalar_lea.sflag [#allocation3], %s259
          %s261 = sand.u32 %s75, 1
          %s262 = smul.addr %s261, 8
          %s263 = scalar_lea.vmem [#allocation2], %s262
          %s265 = ssub.s32 128, 128
          %266 = vsyncadd %s260, %s265
          %s267 = smul.addr %s32, 128
          %s268 = scalar_lea.hbm %s1, %s267
          %s270 = sshll.u32 %s263, 4
          %s271 = int_to_ptr.vmem [resolvable:$true] %s270
          %273 = dma.hbm_to_vmem [thread:$0]  %s268, 128, %s271, %s260
        $region24: #{tpu_custom_call.1} parent=15 // pred_fallthru
          _
        // Predicated region
        $region25: #{tpu_custom_call.1} parent=15 // pred_check
          %p274 = pneg %p111
        $region26: #{tpu_custom_call.1} parent=15 // pred_check_branch
          %276 = sbr.rel (%p274) target = $region28
        $region27: #{tpu_custom_call.1} parent=15 // pred_region
          %s277 = sand.u32 %s101, 1
          %s278 = scalar_lea.sflag [#allocation6], %s277
          %s279 = sand.u32 %s101, 1
          %s280 = smul.addr %s279, 8
          %s281 = scalar_lea.vmem [#allocation5], %s280
          %s283 = ssub.s32 128, 128
          %284 = vsyncadd %s278, %s283
          %s285 = smul.addr %s32, 128
          %s286 = scalar_lea.hbm %s2, %s285
          %s288 = sshll.u32 %s281, 4
          %s289 = int_to_ptr.vmem [resolvable:$true] %s288
          %291 = dma.hbm_to_vmem [thread:$0]  %s286, 128, %s289, %s278
        $region28: #{tpu_custom_call.1} parent=15 // pred_fallthru
          _
        // Predicated region
        $region29: #{tpu_custom_call.1} parent=15 // pred_check
          %p292 = pneg %p137
        $region30: #{tpu_custom_call.1} parent=15 // pred_check_branch
          %294 = sbr.rel (%p292) target = $region32
        $region31: #{tpu_custom_call.1} parent=15 // pred_region
          %p295 = scmp.lt.s32.totalorder %s32, 1
          %s296 = scalar_select %p295, %s32, 1
          %s297 = scalar_lea.vmem %s3, %s296
        $region32: #{tpu_custom_call.1} parent=15 // pred_fallthru
          _
        // Predicated region
        $region33: #{tpu_custom_call.1} parent=15 // pred_check
          %p298 = pneg %p165
        $region34: #{tpu_custom_call.1} parent=15 // pred_check_branch
          %300 = sbr.rel (%p298) target = $region36
        $region35: #{tpu_custom_call.1} parent=15 // pred_region
          %p301 = scmp.lt.s32.totalorder %s32, 1
          %s302 = scalar_select %p301, %s32, 1
          %p303 = scmp.lt.s32.totalorder %s33, 0
          %s304 = scalar_select %p303, %s33, 0
          %s305 = sadd.s32 %s304, %s302
          %s306 = smul.addr %s305, 8
          %s307 = scalar_lea.vmem %s4, %s306
        $region36: #{tpu_custom_call.1} parent=15 // pred_fallthru
          _
      $region16: #{tpu_custom_call.1} parent=5 // pred_fallthru
        _
      %p308 = scmp.le.s32.totalorder 1, %s25
      %p309 = scmp.lt.s32.totalorder %s25, 3
      %p310 = pnand %p308, %p309
      %p311 = pneg %p310
      // Predicated region
      $region37: #{tpu_custom_call.1} parent=5 // pred_check
        _
      $region38: #{tpu_custom_call.1} parent=5 // pred_check_branch
        %313 = sbr.rel (%p310) target = $region40
      $region39: #{tpu_custom_call.1} parent=5 // pred_region
        %s314 = ssub.s32 %s25, 1
        %s315 = sand.u32 %s78, 1
        %s316 = scalar_lea.sflag [#allocation3], %s315
        %s317 = sand.u32 %s78, 1
        %s318 = smul.addr %s317, 8
        %s319 = scalar_lea.vmem [#allocation2], %s318
        // Predicated region
        $region41: #{tpu_custom_call.1} parent=39 // pred_check
          %p320 = pneg %p91
        $region42: #{tpu_custom_call.1} parent=39 // pred_check_branch
          %322 = sbr.rel (%p320) target = $region44
        $region43: #{tpu_custom_call.1} parent=39 // pred_region
          %323 = dma.done %s316, 128
        $region44: #{tpu_custom_call.1} parent=39 // pred_fallthru
          _
        %s324 = sand.u32 %s104, 1
        %s325 = scalar_lea.sflag [#allocation6], %s324
        %s326 = sand.u32 %s104, 1
        %s327 = smul.addr %s326, 8
        %s328 = scalar_lea.vmem [#allocation5], %s327
        // Predicated region
        $region45: #{tpu_custom_call.1} parent=39 // pred_check
          %p329 = pneg %p117
        $region46: #{tpu_custom_call.1} parent=39 // pred_check_branch
          %331 = sbr.rel (%p329) target = $region48
        $region47: #{tpu_custom_call.1} parent=39 // pred_region
          %332 = dma.done %s325, 128
        $region48: #{tpu_custom_call.1} parent=39 // pred_fallthru
          _
        %p333 = scmp.lt.s32.totalorder %s34, 1
        %s334 = scalar_select %p333, %s34, 1
        %p335 = scmp.lt.s32.totalorder %s35, 0
        %s336 = scalar_select %p335, %s35, 0
        %s337 = sadd.s32 %s336, %s334
        %s338 = smul.addr %s337, 8
        %s339 = scalar_lea.vmem %s0, %s338
        %p340 = pneg %p65
        %p341 = pneg %p62
        %s342 = sand.u32 %s78, 1
        %s343 = scalar_lea.sflag [#allocation3], %s342
        %s344 = sand.u32 %s78, 1
        %s345 = smul.addr %s344, 8
        %s346 = scalar_lea.vmem [#allocation2], %s345
        %p347 = pneg %p91
        %p348 = pneg %p88
        %s349 = sand.u32 %s104, 1
        %s350 = scalar_lea.sflag [#allocation6], %s349
        %s351 = sand.u32 %s104, 1
        %s352 = smul.addr %s351, 8
        %s353 = scalar_lea.vmem [#allocation5], %s352
        %p354 = pneg %p117
        %p355 = pneg %p114
        %p356 = scmp.lt.s32.totalorder %s34, 1
        %s357 = scalar_select %p356, %s34, 1
        %s358 = scalar_lea.vmem %s3, %s357
        %p359 = pneg %p143
        %p360 = pneg %p140
        %p361 = scmp.lt.s32.totalorder %s34, 1
        %s362 = scalar_select %p361, %s34, 1
        %p363 = scmp.lt.s32.totalorder %s35, 0
        %s364 = scalar_select %p363, %s35, 0
        %s365 = sadd.s32 %s364, %s362
        %s366 = smul.addr %s365, 8
        %s367 = scalar_lea.vmem %s4, %s366
        %p368 = pneg %p171
        %p369 = pneg %p168
        %p370 = pneg %p199
        %p371 = pneg %p196
        %s372 = sand.u32 %s186, 1
        %s373 = scalar_lea.sflag [#allocation4], %s372
        %s374 = sand.u32 %s186, 1
        %s375 = smul.addr %s374, 8
        %s376 = scalar_lea.vmem [#allocation7], %s375
        %p377 = pneg %p227
        %p378 = pneg %p224
        %s379 = sand.u32 %s214, 1
        %s380 = scalar_lea.sflag [#allocation9], %s379
        %s381 = sand.u32 %s214, 1
        %s382 = smul.addr %s381, 8
        %s383 = scalar_lea.vmem [#allocation8], %s382
        %p384 = scmp.lt.s32.totalorder %s34, 1
        %s385 = scalar_select %p384, %s34, 1
        %p386 = scmp.lt.s32.totalorder %s35, 0
        %s387 = scalar_select %p386, %s35, 0
        %s388 = sadd.s32 %s387, %s385
        %s389 = smul.addr %s388, 8
        %s390 = scalar_lea.vmem %s0, %s389
        %p391 = scmp.lt.s32.totalorder %s34, 1
        %s392 = scalar_select %p391, %s34, 1
        %s393 = scalar_lea.vmem %s3, %s392
        %p394 = scmp.lt.s32.totalorder %s34, 1
        %s395 = scalar_select %p394, %s34, 1
        %p396 = scmp.lt.s32.totalorder %s35, 0
        %s397 = scalar_select %p396, %s35, 0
        %s398 = sadd.s32 %s397, %s395
        %s399 = smul.addr %s398, 8
        %s400 = scalar_lea.vmem %s4, %s399
        %v401 = vld [vmem:[%s390] sm:$0xff]
        %v402 = vmul.f32 %v401, 0.17677669
        %v403 = vld [vmem:[%s319] sm:$0xff]
        %v404 = vld [vmem:[%s393] sm:$0x1]
        %v405 = vld [vmem:[%s400] sm:$0xff]
        %vm406 = vcmask 261120
        %v408 = vsel %vm406, %v402, 0
        %v411 = vsel %vm406, %v403, 0
        %413 = vmatprep.subr.mxu0 0.0
        %414 = vmatpush1.xpose.msra.mxu0 %v411
        %415 = vmatprep.subr.mxu0 0.0
        %416 = vmatpush1.xpose.msra.mxu0 0.0
        %417 = vmatprep.subr.mxu0 0.0
        %418 = vmatpush1.xpose.msra.mxu0 0.0
        %419 = vmatprep.subr.mxu0 0.0
        %420 = vmatpush1.xpose.msra.mxu0 0.0
        %421 = vmatprep.subr.mxu0 0.0
        %422 = vmatpush1.xpose.msra.mxu0 0.0
        %423 = vmatprep.subr.mxu0 0.0
        %424 = vmatpush1.xpose.msra.mxu0 0.0
        %425 = vmatprep.subr.mxu0 0.0
        %426 = vmatpush1.xpose.msra.mxu0 0.0
        %427 = vmatprep.subr.mxu0 0.0
        %428 = vmatpush1.xpose.msra.mxu0 0.0
        %429 = vmatprep.subr.mxu0 0.0
        %430 = vmatpush1.xpose.msra.mxu0 0.0
        %431 = vmatprep.subr.mxu0 0.0
        %432 = vmatpush1.xpose.msra.mxu0 0.0
        %433 = vmatprep.subr.mxu0 0.0
        %434 = vmatpush1.xpose.msra.mxu0 0.0
        %435 = vmatprep.subr.mxu0 0.0
        %436 = vmatpush1.xpose.msra.mxu0 0.0
        %437 = vmatprep.subr.mxu0 0.0
        %438 = vmatpush1.xpose.msra.mxu0 0.0
        %439 = vmatprep.subr.mxu0 0.0
        %440 = vmatpush1.xpose.msra.mxu0 0.0
        %441 = vmatprep.subr.mxu0 0.0
        %442 = vmatpush1.xpose.msra.mxu0 0.0
        %443 = vmatprep.subr.mxu0 0.0
        %444 = vmatpush1.xpose.msra.mxu0 0.0
        %445 = vmatprep.subr.mxu0 0.0
        %446 = vmatpush1.xpose.msra.mxu0 0.0
        %447 = vmatprep.subr.mxu0 0.0
        %448 = vmatpush1.xpose.msra.mxu0 0.0
        %449 = vmatprep.subr.mxu0 0.0
        %450 = vmatpush1.xpose.msra.mxu0 0.0
        %451 = vmatprep.subr.mxu0 0.0
        %452 = vmatpush1.xpose.msra.mxu0 0.0
        %453 = vmatprep.subr.mxu0 0.0
        %454 = vmatpush1.xpose.msra.mxu0 0.0
        %455 = vmatprep.subr.mxu0 0.0
        %456 = vmatpush1.xpose.msra.mxu0 0.0
        %457 = vmatprep.subr.mxu0 0.0
        %458 = vmatpush1.xpose.msra.mxu0 0.0
        %459 = vmatprep.subr.mxu0 0.0
        %460 = vmatpush1.xpose.msra.mxu0 0.0
        %461 = vmatprep.subr.mxu0 0.0
        %462 = vmatpush1.xpose.msra.mxu0 0.0
        %463 = vmatprep.subr.mxu0 0.0
        %464 = vmatpush1.xpose.msra.mxu0 0.0
        %465 = vmatprep.subr.mxu0 0.0
        %466 = vmatpush1.xpose.msra.mxu0 0.0
        %467 = vmatprep.subr.mxu0 0.0
        %468 = vmatpush1.xpose.msra.mxu0 0.0
        %469 = vmatprep.subr.mxu0 0.0
        %470 = vmatpush1.xpose.msra.mxu0 0.0
        %471 = vmatprep.subr.mxu0 0.0
        %472 = vmatpush1.xpose.msra.mxu0 0.0
        %473 = vmatprep.subr.mxu0 0.0
        %474 = vmatpush1.xpose.msra.mxu0 0.0
        %475 = vmatprep.subr.mxu0 0.0
        %476 = vmatpush1.xpose.msra.mxu0 0.0
        %477 = vmatprep.mubr.f32.mxu0 0.0
        %478 = vmatmul.mubr.f32.gmra.mrb[0].mxu0 %v408
        %v479 = vpop.f32.mrb[0].mxu0
        %v480 = vadd.f32 0.0, %v479
        %v481 = vpop.f32.mrb[0].mxu0
        %482 = vdwg.mxu0
        %vm483 = vcmp.gt.f32.partialorder %v404, 0.0
        %v484 = vsel %vm483, 1, 0
        %v485 = vlaneseq
        %v486 = vshrl.u32 %v485, 7
        %v487 = vsub.s32 0, %v486
        %v488 = vrot.slane %v484, %v487
        %vm489 = vcmp.eq.s32.totalorder %v488, 1
        %v490 = vsel %vm489, -inf, %v480
        %vm491 = vcmask 64512
        %v492 = vsel %vm491, %v490, -inf
        %493 = vmax.xlane.f32.xlu0 %v492
        %v494 = vpop.xlane.xlu0 %493
        %v495 = vsub.f32 %v490, %v494
        %v496 = vmul.f32 %v495, 1.442695
        %v497 = vpow.pop %v496
        %v498 = vsel %vm491, %v497, 0.0
        %499 = vadd.xlane.f32.xlu0 %v498
        %v500 = vpop.xlane.xlu0 %499
        %v501 = vrcp.pop %v500
        %v502 = vmul.f32 1.0, %v501
        %v503 = vmul.f32 %v497, %v502
        %vm504 = vcmp.gt.f32.partialorder %v405, 0.0
        %v505 = vsel %vm504, 1, 0
        %506 = vset.pattern.permute.xlu0 0
        %507 = vperm.xlu0 %506, %v505
        %v508 = vpop.permute.xlu0 %507
        %vm509 = vcmp.eq.s32.totalorder %v508, 1
        %v510 = vsel %vm509, 0.0, %v503
        %v511 = vld [vmem:[%s328] sm:$0xff]
        %v513 = vsel %vm491, %v510, 0
        %515 = vmatprep.subr.mxu0 0.0
        %516 = vmatpush1.msra.mxu0 %v511
        %517 = vmatprep.subr.mxu0 0.0
        %518 = vmatpush1.msra.mxu0 0.0
        %519 = vmatprep.subr.mxu0 0.0
        %520 = vmatpush1.msra.mxu0 0.0
        %521 = vmatprep.subr.mxu0 0.0
        %522 = vmatpush1.msra.mxu0 0.0
        %523 = vmatprep.subr.mxu0 0.0
        %524 = vmatpush1.msra.mxu0 0.0
        %525 = vmatprep.subr.mxu0 0.0
        %526 = vmatpush1.msra.mxu0 0.0
        %527 = vmatprep.subr.mxu0 0.0
        %528 = vmatpush1.msra.mxu0 0.0
        %529 = vmatprep.subr.mxu0 0.0
        %530 = vmatpush1.msra.mxu0 0.0
        %531 = vmatprep.subr.mxu0 0.0
        %532 = vmatpush1.msra.mxu0 0.0
        %533 = vmatprep.subr.mxu0 0.0
        %534 = vmatpush1.msra.mxu0 0.0
        %535 = vmatprep.subr.mxu0 0.0
        %536 = vmatpush1.msra.mxu0 0.0
        %537 = vmatprep.subr.mxu0 0.0
        %538 = vmatpush1.msra.mxu0 0.0
        %539 = vmatprep.subr.mxu0 0.0
        %540 = vmatpush1.msra.mxu0 0.0
        %541 = vmatprep.subr.mxu0 0.0
        %542 = vmatpush1.msra.mxu0 0.0
        %543 = vmatprep.subr.mxu0 0.0
        %544 = vmatpush1.msra.mxu0 0.0
        %545 = vmatprep.subr.mxu0 0.0
        %546 = vmatpush1.msra.mxu0 0.0
        %547 = vmatprep.subr.mxu0 0.0
        %548 = vmatpush1.msra.mxu0 0.0
        %549 = vmatprep.subr.mxu0 0.0
        %550 = vmatpush1.msra.mxu0 0.0
        %551 = vmatprep.subr.mxu0 0.0
        %552 = vmatpush1.msra.mxu0 0.0
        %553 = vmatprep.subr.mxu0 0.0
        %554 = vmatpush1.msra.mxu0 0.0
        %555 = vmatprep.subr.mxu0 0.0
        %556 = vmatpush1.msra.mxu0 0.0
        %557 = vmatprep.subr.mxu0 0.0
        %558 = vmatpush1.msra.mxu0 0.0
        %559 = vmatprep.subr.mxu0 0.0
        %560 = vmatpush1.msra.mxu0 0.0
        %561 = vmatprep.subr.mxu0 0.0
        %562 = vmatpush1.msra.mxu0 0.0
        %563 = vmatprep.subr.mxu0 0.0
        %564 = vmatpush1.msra.mxu0 0.0
        %565 = vmatprep.subr.mxu0 0.0
        %566 = vmatpush1.msra.mxu0 0.0
        %567 = vmatprep.subr.mxu0 0.0
        %568 = vmatpush1.msra.mxu0 0.0
        %569 = vmatprep.subr.mxu0 0.0
        %570 = vmatpush1.msra.mxu0 0.0
        %571 = vmatprep.subr.mxu0 0.0
        %572 = vmatpush1.msra.mxu0 0.0
        %573 = vmatprep.subr.mxu0 0.0
        %574 = vmatpush1.msra.mxu0 0.0
        %575 = vmatprep.subr.mxu0 0.0
        %576 = vmatpush1.msra.mxu0 0.0
        %577 = vmatprep.subr.mxu0 0.0
        %578 = vmatpush1.msra.mxu0 0.0
        %579 = vmatprep.mubr.f32.mxu0 0.0
        %580 = vmatmul.mubr.f32.gmra.mrb[0].mxu0 %v513
        %v581 = vpop.f32.mrb[0].mxu0
        %v582 = vadd.f32 0.0, %v581
        %v583 = vpop.f32.mrb[0].mxu0
        %584 = vdwg.mxu0
        %585 = vst.msk [vmem:[%s376] sm:$0xff] %vm406, %v582
        %586 = vst.msk [vmem:[%s383] sm:$0xff] %vm491, %v510
        %s587 = sand.u32 %s186, 1
        %s588 = scalar_lea.sflag [#allocation4], %s587
        %s589 = sand.u32 %s186, 1
        %s590 = smul.addr %s589, 8
        %s591 = scalar_lea.vmem [#allocation7], %s590
        %s592 = sand.u32 %s214, 1
        %s593 = scalar_lea.sflag [#allocation9], %s592
        %s594 = sand.u32 %s214, 1
        %s595 = smul.addr %s594, 8
        %s596 = scalar_lea.vmem [#allocation8], %s595
        // Predicated region
        $region49: #{tpu_custom_call.1} parent=39 // pred_check
          %p597 = pneg %p196
        $region50: #{tpu_custom_call.1} parent=39 // pred_check_branch
          %599 = sbr.rel (%p597) target = $region52
        $region51: #{tpu_custom_call.1} parent=39 // pred_region
          %s601 = ssub.s32 128, 128
          %602 = vsyncadd %s588, %s601
          %s603 = sadd.s32 %s35, %s34
          %s604 = smul.addr %s603, 128
          %s605 = scalar_lea.hbm %s5, %s604
          %s607 = sshll.u32 %s591, 4
          %s608 = int_to_ptr.vmem [resolvable:$true] %s607
          %610 = dma.vmem_to_hbm [thread:$0]  %s608, 128, %s605, %s588
        $region52: #{tpu_custom_call.1} parent=39 // pred_fallthru
          _
        // Predicated region
        $region53: #{tpu_custom_call.1} parent=39 // pred_check
          %p611 = pneg %p224
        $region54: #{tpu_custom_call.1} parent=39 // pred_check_branch
          %613 = sbr.rel (%p611) target = $region56
        $region55: #{tpu_custom_call.1} parent=39 // pred_region
          %s615 = ssub.s32 128, 128
          %616 = vsyncadd %s593, %s615
          %s617 = sadd.s32 %s35, %s34
          %s618 = smul.addr %s617, 128
          %s619 = scalar_lea.hbm %s6, %s618
          %s621 = sshll.u32 %s596, 4
          %s622 = int_to_ptr.vmem [resolvable:$true] %s621
          %624 = dma.vmem_to_hbm [thread:$0]  %s622, 128, %s619, %s593
        $region56: #{tpu_custom_call.1} parent=39 // pred_fallthru
          _
      $region40: #{tpu_custom_call.1} parent=5 // pred_fallthru
        _
      %p625 = scmp.le.s32.totalorder 2, %s25
      // Predicated region
      $region57: #{tpu_custom_call.1} parent=5 // pred_check
        %p626 = pneg %p625
      $region58: #{tpu_custom_call.1} parent=5 // pred_check_branch
        %628 = sbr.rel (%p626) target = $region60
      $region59: #{tpu_custom_call.1} parent=5 // pred_region
        %s629 = ssub.s32 %s25, 2
        // Predicated region
        $region61: #{tpu_custom_call.1} parent=59 // pred_check
          %p630 = pneg %p202
        $region62: #{tpu_custom_call.1} parent=59 // pred_check_branch
          %632 = sbr.rel (%p630) target = $region64
        $region63: #{tpu_custom_call.1} parent=59 // pred_region
          %s633 = sand.u32 %s187, 1
          %s634 = scalar_lea.sflag [#allocation4], %s633
          %s635 = sand.u32 %s187, 1
          %s636 = smul.addr %s635, 8
          %s637 = scalar_lea.vmem [#allocation7], %s636
          %638 = dma.done %s634, 128
        $region64: #{tpu_custom_call.1} parent=59 // pred_fallthru
          _
        // Predicated region
        $region65: #{tpu_custom_call.1} parent=59 // pred_check
          %p639 = pneg %p230
        $region66: #{tpu_custom_call.1} parent=59 // pred_check_branch
          %641 = sbr.rel (%p639) target = $region68
        $region67: #{tpu_custom_call.1} parent=59 // pred_region
          %s642 = sand.u32 %s215, 1
          %s643 = scalar_lea.sflag [#allocation9], %s642
          %s644 = sand.u32 %s215, 1
          %s645 = smul.addr %s644, 8
          %s646 = scalar_lea.vmem [#allocation8], %s645
          %647 = dma.done %s643, 128
        $region68: #{tpu_custom_call.1} parent=59 // pred_fallthru
          _
      $region60: #{tpu_custom_call.1} parent=5 // pred_fallthru
        _
    $region6: #{tpu_custom_call.1} parent=1 // loop_footer
      %s29 = sadd.s32 1, %s25
    $region7: #{tpu_custom_call.1} parent=1 // loop_footer_branch
      %24 = sbr.rel target = $region3
    $region8: #{tpu_custom_call.1} parent=1 // loop_exit
      _
    %648 = vsyncpa [#allocation3], 1
    %s649 = scalar_lea.sflag [#allocation3], 1
    %650 = vsyncpa %s649, 1
    %651 = vsyncpa [#allocation6], 1
    %s652 = scalar_lea.sflag [#allocation6], 1
    %653 = vsyncpa %s652, 1
    %654 = vsyncpa [#allocation4], 1
    %s655 = scalar_lea.sflag [#allocation4], 1
    %656 = vsyncpa %s655, 1
    %657 = vsyncpa [#allocation9], 1
    %s658 = scalar_lea.sflag [#allocation9], 1
    %659 = vsyncpa %s658, 1

</llo_original>
